<compile_context>
chip_gen: v7x
topology: tpu7x:2x2x1
jax: 0.10.0
libtpu: 0.0.40
codegen_flags: <defaults>
</compile_context>

<pallas_src>
import functools

import jax
import jax.numpy as jnp
from jax import lax
from jax.experimental import pallas as pl
from jax.experimental.pallas import tpu as pltpu

_EPS = 1e-6


# ----------------------------------------------------------------------------
# Tiling / VMEM helpers.
# ----------------------------------------------------------------------------
@functools.lru_cache(maxsize=1)
def _tile_caps():
    """(row_cap, col_cap): bigger tiles on 128 MiB-VMEM parts (v5e/v6e),
    conservative caps on v7x (64 MiB per TensorCore)."""
    try:
        vmem = getattr(pltpu.get_tpu_info(), "vmem_capacity_bytes", 64 << 20)
    except Exception:
        vmem = 64 << 20
    if vmem >= (100 << 20):
        return 1024, 4096
    return 512, 2048


def _pick_tile(dim, align, cap, min_blocks=1):
    """(align)-aligned tile <= min(cap, dim); tiny dims use the full dim
    (always a legal block).  min_blocks>1 caps the tile so a 'parallel' axis
    produces at least that many blocks (keeps both v7x TensorCores busy)."""
    if dim <= align:
        return dim
    t = min(cap, (dim // align) * align)
    if min_blocks > 1 and dim >= min_blocks * align:
        t = min(t, max(align, ((dim // min_blocks) // align) * align))
    return t


def _vmem_limit(*block_bytes):
    """Request only what the double-buffered working set needs, plus headroom;
    never the whole physical VMEM."""
    need = 2 * sum(int(b) for b in block_bytes)
    return int(min(max(need + (8 << 20), 16 << 20), 48 << 20))


# ----------------------------------------------------------------------------
# Pallas kernel 1: element-wise per-channel affine  o = x * a + b
#   forward: a = scale,   b = scale * loc
#   reverse: a = 1/scale, b = -loc          (no per-element divide)
# params arrive f32 as a single packed block ((tr,2) row-bcast or (2,tc)).
# ----------------------------------------------------------------------------
def _affine_kernel(x_ref, p_ref, o_ref, *, row_bcast):
    if row_bcast:
        a = p_ref[:, 0:1]
        b = p_ref[:, 1:2]
    else:
        a = p_ref[0:1, :]
        b = p_ref[1:2, :]
    o_ref[...] = (x_ref[...] * a + b).astype(o_ref.dtype)


def _affine_pallas(x2d, params, *, row_bcast):
    """x2d: (R, Ccols); params f32: (R,2) if row_bcast else (2,Ccols)."""
    R, Ccols = x2d.shape
    row_cap, col_cap = _tile_caps()
    tr = _pick_tile(R, 8, row_cap, min_blocks=2)
    tc = _pick_tile(Ccols, 128, col_cap)
    grid = (pl.cdiv(R, tr), pl.cdiv(Ccols, tc))  # edge blocks: writes masked

    if row_bcast:
        p_spec = pl.BlockSpec((tr, 2), lambda i, j: (i, 0))
        p_bytes = tr * 2 * 4
    else:
        p_spec = pl.BlockSpec((2, tc), lambda i, j: (0, j))
        p_bytes = 2 * tc * 4
    x_bytes = tr * tc * x2d.dtype.itemsize

    kernel = functools.partial(_affine_kernel, row_bcast=row_bcast)
    return pl.pallas_call(
        kernel,
        out_shape=jax.ShapeDtypeStruct((R, Ccols), x2d.dtype),
        grid=grid,
        in_specs=[pl.BlockSpec((tr, tc), lambda i, j: (i, j)), p_spec],
        out_specs=pl.BlockSpec((tr, tc), lambda i, j: (i, j)),
        compiler_params=pltpu.CompilerParams(
            dimension_semantics=("parallel", "parallel"),
            vmem_limit_bytes=_vmem_limit(x_bytes, x_bytes, p_bytes),
        ),
    )(x2d, params)


# ----------------------------------------------------------------------------
# Pallas kernels 2/3: per-row reductions for the data-dependent init.
# Lane-preserving 128-wide partial sums (VPU only); (tr, W) f32 accumulator
# output blocks stay resident across the trailing "arbitrary" axis; padded
# tail columns are masked via iota (edge blocks never pollute the sums).
# ----------------------------------------------------------------------------
def _row_sum_kernel(x_ref, s_ref, *, n_valid, n_chunks, w):
    k = pl.program_id(1)

    @pl.when(k == 0)
    def _():
        s_ref[...] = jnp.zeros_like(s_ref)

    tk = n_chunks * w
    cols = k * tk + lax.broadcasted_iota(jnp.int32, x_ref.shape, 1)
    x = jnp.where(cols < n_valid, x_ref[...].astype(jnp.float32), 0.0)
    acc = jnp.zeros((x_ref.shape[0], w), jnp.float32)
    for i in range(n_chunks):  # lane-preserving partial sums (no XLU)
        acc = acc + x[:, i * w:(i + 1) * w]
    s_ref[...] += acc


def _row_css_kernel(x_ref, m_ref, v_ref, *, n_valid, n_chunks, w):
    k = pl.program_id(1)

    @pl.when(k == 0)
    def _():
        v_ref[...] = jnp.zeros_like(v_ref)

    tk = n_chunks * w
    cols = k * tk + lax.broadcasted_iota(jnp.int32, x_ref.shape, 1)
    d = jnp.where(cols < n_valid,
                  x_ref[...].astype(jnp.float32) - m_ref[...], 0.0)
    d = d * d
    acc = jnp.zeros((x_ref.shape[0], w), jnp.float32)
    for i in range(n_chunks):
        acc = acc + d[:, i * w:(i + 1) * w]
    v_ref[...] += acc


def _row_reduce_pallas(x2d, mean_rows=None):
    """mean_rows=None  -> per-row sum (pass 1)
       mean_rows=(R,1) -> per-row centered sum of squares (pass 2)
    Returns an (R, W) f32 array; the final W->1 reduce is tiny JAX."""
    R, M = x2d.shape
    row_cap, col_cap = _tile_caps()
    tr = _pick_tile(R, 8, row_cap, min_blocks=2)
    tk = _pick_tile(M, 128, col_cap)
    w = 128 if M >= 128 else M
    n_chunks = tk // w
    grid = (pl.cdiv(R, tr), pl.cdiv(M, tk))

    x_spec = pl.BlockSpec((tr, tk), lambda i, k: (i, k))
    out_spec = pl.BlockSpec((tr, w), lambda i, k: (i, 0))  # resident accumulator
    x_bytes = tr * tk * x2d.dtype.itemsize
    o_bytes = tr * w * 4

    common = dict(n_valid=M, n_chunks=n_chunks, w=w)
    if mean_rows is None:
        kernel = functools.partial(_row_sum_kernel, **common)
        in_specs = [x_spec]
        operands = (x2d,)
        p_bytes = 0
    else:
        kernel = functools.partial(_row_css_kernel, **common)
        in_specs = [x_spec, pl.BlockSpec((tr, 1), lambda i, k: (i, 0))]
        operands = (x2d, mean_rows)
        p_bytes = tr * 4

    return pl.pallas_call(
        kernel,
        out_shape=jax.ShapeDtypeStruct((R, w), jnp.float32),
        grid=grid,
        in_specs=in_specs,
        out_specs=out_spec,
        compiler_params=pltpu.CompilerParams(
            dimension_semantics=("parallel", "arbitrary"),
            vmem_limit_bytes=_vmem_limit(x_bytes, o_bytes, p_bytes),
        ),
    )(*operands)


# ----------------------------------------------------------------------------
# Data-dependent init (two-pass, numerically stable).
# ----------------------------------------------------------------------------
def actnorm_init_stats(x, eps=_EPS):
    """x: (N,C,H,W) or (N,C).  Returns (loc, scale), each (C,) float32."""
    if x.ndim == 2:
        x = x[:, :, None, None]
    n, c, h, w = x.shape
    R, M = n * c, h * w
    x2d = x.reshape(R, M)
    cnt = jnp.float32(n * h * w)

    # Pass 1: per-row sums -> per-channel mean.
    s1 = _row_reduce_pallas(x2d)                               # (R, W) f32
    mean = s1.reshape(n, c, -1).sum(axis=(0, 2)) / cnt         # (C,)

    # Pass 2: per-row centered sum of squares -> unbiased per-channel variance.
    mean_rows = jnp.tile(mean, n).reshape(R, 1)                # row r -> mean[r % C]
    css = _row_reduce_pallas(x2d, mean_rows)                   # (R, W) f32
    # TODO(synk): torch.std(ddof=1) gives NaN when n*h*w == 1; we match that.
    var = jnp.maximum(css.reshape(n, c, -1).sum(axis=(0, 2)), 0.0) / (cnt - 1.0)
    std = jnp.sqrt(var)
    loc = -mean
    scale = 1.0 / (std + eps)
    return loc, scale


# ----------------------------------------------------------------------------
# ActNorm forward / reverse (functional; the PyTorch `initialized` uint8
# buffer is Python-level state handled by the caller running init first).
# ----------------------------------------------------------------------------
def actnorm_apply(loc, scale, x, *, reverse=False):
    """loc, scale: (C,) (or broadcastable). x: (N,C,H,W) or (N,C)."""
    loc = jnp.reshape(loc, (-1,)).astype(jnp.float32)
    scale = jnp.reshape(scale, (-1,)).astype(jnp.float32)
    if reverse:
        a = 1.0 / scale          # O(C): divide once per channel, not per element
        b = -loc
    else:
        a = scale
        b = scale * loc

    orig_shape = x.shape
    if x.ndim == 2:
        n, c = x.shape
        x2d = x
        params = jnp.stack([a, b], axis=0)                         # (2, C)
        row_bcast = False
    else:
        n, c, h, w = x.shape
        x2d = x.reshape(n * c, h * w)
        params = jnp.stack([jnp.tile(a, n), jnp.tile(b, n)], axis=1)  # (N*C, 2)
        row_bcast = True
    out2d = _affine_pallas(x2d, params, row_bcast=row_bcast)
    return out2d.reshape(orig_shape)


def actnorm_forward(loc, scale, x, *, logdet=False, reverse=False):
    if reverse:
        return actnorm_apply(loc, scale, x, reverse=True)
    h = actnorm_apply(loc, scale, x, reverse=False)
    if logdet:
        if x.ndim == 2:
            height = width = 1
        else:
            height, width = x.shape[2], x.shape[3]
        # O(C) parameter-side scalar math; kept in plain JAX.
        ld = height * width * jnp.sum(jnp.log(jnp.abs(scale.astype(jnp.float32))))
        ld = ld * jnp.ones((x.shape[0],), x.dtype)
        return h, ld
    return h


# ----------------------------------------------------------------------------
# Self-test against a pure-JAX reference.
# ----------------------------------------------------------------------------
if __name__ == "__main__":
    key = jax.random.PRNGKey(0)
    k1, k2 = jax.random.split(key)

    # 4-D path: (N, C, H, W) = (2, 4, 16, 16), uninitialized ActNorm.
    x = jax.random.normal(k1, (2, 4, 16, 16), jnp.float32) * 1.7 + 0.3

    loc, scale = actnorm_init_stats(x)                 # initialized == 0 path
    h, ld = actnorm_forward(loc, scale, x, logdet=True)
    h = jax.block_until_ready(h)
    ld = jax.block_until_ready(ld)

    # Pure-JAX reference (mirrors the PyTorch module exactly).
    flat = jnp.transpose(x, (1, 0, 2, 3)).reshape(x.shape[1], -1)
    ref_loc = -flat.mean(axis=1)
    ref_scale = 1.0 / (jnp.std(flat, axis=1, ddof=1) + _EPS)
    ref_h = ref_scale[None, :, None, None] * (x + ref_loc[None, :, None, None])
    ref_ld = (x.shape[2] * x.shape[3] * jnp.sum(jnp.log(jnp.abs(ref_scale)))
              * jnp.ones((x.shape[0],), jnp.float32))

    assert h.shape == x.shape, h.shape
    assert jnp.allclose(loc, ref_loc, atol=1e-5, rtol=1e-5)
    assert jnp.allclose(scale, ref_scale, atol=1e-4, rtol=1e-4)
    assert jnp.allclose(h, ref_h, atol=1e-4, rtol=1e-4)
    assert jnp.allclose(ld, ref_ld, atol=1e-4, rtol=1e-4)

    # Reverse round-trip.
    x_rec = jax.block_until_ready(actnorm_forward(loc, scale, h, reverse=True))
    assert jnp.allclose(x_rec, x, atol=1e-4, rtol=1e-4)

    # 2-D ("squeeze") path: (N, C) = (2, 4).
    x2 = jax.random.normal(k2, (2, 4), jnp.float32)
    h2 = jax.block_until_ready(actnorm_forward(loc, scale, x2))
    ref_h2 = ref_scale[None, :] * (x2 + ref_loc[None, :])
    assert h2.shape == x2.shape, h2.shape
    assert jnp.allclose(h2, ref_h2, atol=1e-4, rtol=1e-4)

    print("KERNEL_OK")
</pallas_src>

<mosaic_0001>
module attributes {stable_mosaic.version = 11 : i64} {
  func.func @_row_sum_kernel(%arg0: i32, %arg1: i32, %arg2: memref<8x256xf32, #tpu.memory_space<vmem>>, %arg3: memref<8x128xf32, #tpu.memory_space<vmem>>) attributes {dimension_semantics = [#tpu.dimension_semantics<parallel>, #tpu.dimension_semantics<arbitrary>], iteration_bounds = array<i64: 1, 1>, scalar_prefetch = 0 : i64, scratch_operands = 0 : i64, tpu.core_type = #tpu.core_type<tc>, window_params = [{transform_indices = @transform_0, window_bounds = array<i64: 8, 256>}, {transform_indices = @transform_1, window_bounds = array<i64: 8, 128>}]} {
    %c0_i32 = arith.constant 0 : i32
    %0 = arith.cmpi eq, %arg1, %c0_i32 : i32
    %1 = arith.extui %0 : i1 to i32
    %c0_i32_0 = arith.constant 0 : i32
    %2 = arith.cmpi ne, %1, %c0_i32_0 : i32
    scf.if %2 {
      %cst_8 = arith.constant 0.000000e+00 : f32
      %20 = vector.broadcast %cst_8 : f32 to vector<8x128xf32>
      %c0_9 = arith.constant 0 : index
      %c0_10 = arith.constant 0 : index
      %21 = vector.load %arg3[%c0_9, %c0_10] : memref<8x128xf32, #tpu.memory_space<vmem>>, vector<8x128xf32>
      tpu.vector_store %arg3[%c0_9, %c0_10], %20 {strides = array<i32>} : memref<8x128xf32, #tpu.memory_space<vmem>>, vector<8x128xf32>,
    } else {
    }
    %c256_i32 = arith.constant 256 : i32
    %3 = arith.muli %arg1, %c256_i32 : i32
    %4 = tpu.iota {dimensions = array<i32: 1>} : vector<8x256xi32>
    %5 = vector.broadcast %3 : i32 to vector<8x256xi32>
    %6 = arith.addi %5, %4 : vector<8x256xi32>
    %c256_i32_1 = arith.constant 256 : i32
    %7 = vector.broadcast %c256_i32_1 : i32 to vector<8x256xi32>
    %8 = arith.cmpi slt, %6, %7 : vector<8x256xi32>
    %c0 = arith.constant 0 : index
    %c0_2 = arith.constant 0 : index
    %9 = vector.load %arg2[%c0, %c0_2] : memref<8x256xf32, #tpu.memory_space<vmem>>, vector<8x256xf32>
    %cst = arith.constant 0.000000e+00 : f32
    %10 = vector.broadcast %cst : f32 to vector<8x256xf32>
    %11 = arith.select %8, %9, %10 : vector<8x256xi1>, vector<8x256xf32>
    %cst_3 = arith.constant 0.000000e+00 : f32
    %12 = vector.broadcast %cst_3 : f32 to vector<8x128xf32>
    %13 = vector.extract_strided_slice %11 {offsets = [0, 0], sizes = [8, 128], strides = [1, 1]} : vector<8x256xf32> to vector<8x128xf32>
    %14 = arith.addf %12, %13 : vector<8x128xf32>
    %15 = vector.extract_strided_slice %11 {offsets = [0, 128], sizes = [8, 128], strides = [1, 1]} : vector<8x256xf32> to vector<8x128xf32>
    %16 = arith.addf %14, %15 : vector<8x128xf32>
    %c0_4 = arith.constant 0 : index
    %c0_5 = arith.constant 0 : index
    %17 = vector.load %arg3[%c0_4, %c0_5] : memref<8x128xf32, #tpu.memory_space<vmem>>, vector<8x128xf32>
    %18 = arith.addf %17, %16 : vector<8x128xf32>
    %c0_6 = arith.constant 0 : index
    %c0_7 = arith.constant 0 : index
    %19 = vector.load %arg3[%c0_6, %c0_7] : memref<8x128xf32, #tpu.memory_space<vmem>>, vector<8x128xf32>
    tpu.vector_store %arg3[%c0_6, %c0_7], %18 {strides = array<i32>} : memref<8x128xf32, #tpu.memory_space<vmem>>, vector<8x128xf32>,
    return
  }
  func.func @transform_0(%arg0: i32, %arg1: i32) -> (i32, i32) {
    %c0_i32 = arith.constant 0 : i32
    return %arg0, %arg1 : i32, i32
  }
  func.func @transform_1(%arg0: i32, %arg1: i32) -> (i32, i32) {
    %c0_i32 = arith.constant 0 : i32
    %c0_i32_0 = arith.constant 0 : i32
    return %arg0, %c0_i32 : i32, i32
  }
}

</mosaic_0001>

<llo_original>
// kernel: tpu_custom_call.1
$region0: #{tpu_custom_call.1}
  #allocation0 [shape = 'u32[]', space=smem, size = 0x4, offset = 0x4, fixed_abs, tag = 'smem constant byte address 0x4 - core index']
  #allocation1 [shape = 'u32[144,128]{1,0:T(1,128)}', space=vmem, size = 0x12000, scoped, tag = 'internal scratch']
  %s0 = inlined_call_operand.hbm [shape: f32[8,256], index: 0, kind: input, shape index: {}]
  %s1 = inlined_call_operand.hbm [shape: f32[8,128], index: 1, kind: output, shape index: {}]
  %s2 = sld [smem:[#allocation0]]
  $region22: #{tpu_custom_call.1} parent=0
    _
  %s4 = ssub.s32 1, %s2
  %s5 = scalar_select 0, %s4, %s2
  $region1: #{tpu_custom_call.1} parent=0
    #allocation2 [shape = 'u8[8192]{0}', space=vmem, size = 0x2000, scoped, tag = 'input window, operand 0, single buffered']
    #allocation3 [shape = 's32[1]{0}', space=sflag, size = 0x4, scoped, tag = 'scoped memory for tpu_custom_call.1']
    #allocation4 [shape = 's32[1]{0}', space=sflag, size = 0x4, scoped, tag = 'scoped memory for tpu_custom_call.1']
    #allocation5 [shape = 'u8[4096]{0}', space=vmem, size = 0x1000, scoped, tag = 'output window, operand 0, single buffered']
    %6 = vsyncpa [#allocation3], 0
    %7 = vsyncpa [#allocation4], 0
    // Predicated region
    $region2: #{tpu_custom_call.1} parent=1 // pred_check
      _
    $region3: #{tpu_custom_call.1} parent=1 // pred_check_branch
      %9 = sbr.rel (0) target = $region5
    $region4: #{tpu_custom_call.1} parent=1 // pred_region
      %s11 = ssub.s32 256, 256
      %12 = vsyncadd [#allocation3], %s11
      %s14 = sshll.u32 [#allocation2], 4
      %s15 = int_to_ptr.vmem [resolvable:$true] %s14
      %17 = dma.hbm_to_vmem [thread:$0]  %s0, 256, %s15, [#allocation3]
    $region5: #{tpu_custom_call.1} parent=1 // pred_fallthru
      _
    // Predicated region
    $region6: #{tpu_custom_call.1} parent=1 // pred_check
      _
    $region7: #{tpu_custom_call.1} parent=1 // pred_check_branch
      %19 = sbr.rel (0) target = $region9
    $region8: #{tpu_custom_call.1} parent=1 // pred_region
      %20 = dma.done [#allocation3], 256
    $region9: #{tpu_custom_call.1} parent=1 // pred_fallthru
      _
    %p21 = scmp.eq.s32.totalorder 0, 0
    // Predicated region
    $region10: #{tpu_custom_call.1} parent=1 // pred_check
      %p22 = pneg %p21
    $region11: #{tpu_custom_call.1} parent=1 // pred_check_branch
      %24 = sbr.rel (%p22) target = $region13
    $region12: #{tpu_custom_call.1} parent=1 // pred_region
      %25 = vst [vmem:[#allocation5] sm:$0xff] 0.0
    $region13: #{tpu_custom_call.1} parent=1 // pred_fallthru
      _
    %s26 = smul.u32 0, 256
    %v27 = vlaneseq
    %v28 = vand.u32 %v27, 127
    %v29 = vadd.s32 %v28, 128
    %v30 = vstv %s26
    %v31 = vadd.s32 %v30, %v28
    %v32 = vadd.s32 %v30, %v29
    %vm33 = vcmp.lt.s32.totalorder %v31, 256
    %vm34 = vcmp.lt.s32.totalorder %v32, 256
    %v35 = vld [vmem:[#allocation2] sm:$0xff]
    %v36 = vld [vmem:[#allocation2 + $0x8] sm:$0xff]
    %v37 = vsel %vm33, %v35, 0.0
    %v38 = vsel %vm34, %v36, 0.0
    %v39 = vadd.f32 %v37, 0.0
    %v40 = vadd.f32 %v39, %v38
    %v41 = vld [vmem:[#allocation5] sm:$0xff]
    %v42 = vadd.f32 %v41, %v40
    %43 = vst [vmem:[#allocation5] sm:$0xff] %v42
    // Predicated region
    $region14: #{tpu_custom_call.1} parent=1 // pred_check
      _
    $region15: #{tpu_custom_call.1} parent=1 // pred_check_branch
      %45 = sbr.rel (0) target = $region17
    $region16: #{tpu_custom_call.1} parent=1 // pred_region
      %s47 = ssub.s32 128, 128
      %48 = vsyncadd [#allocation4], %s47
      %s50 = sshll.u32 [#allocation5], 4
      %s51 = int_to_ptr.vmem [resolvable:$true] %s50
      %53 = dma.vmem_to_hbm [thread:$0]  %s51, 128, %s1, [#allocation4]
    $region17: #{tpu_custom_call.1} parent=1 // pred_fallthru
      _
    // Predicated region
    $region18: #{tpu_custom_call.1} parent=1 // pred_check
      _
    $region19: #{tpu_custom_call.1} parent=1 // pred_check_branch
      %55 = sbr.rel (0) target = $region21
    $region20: #{tpu_custom_call.1} parent=1 // pred_region
      %56 = dma.done [#allocation4], 128
    $region21: #{tpu_custom_call.1} parent=1 // pred_fallthru
      _
    %57 = vsyncpa [#allocation3], 1
    %58 = vsyncpa [#allocation4], 1

</llo_original>
